<compile_context>
chip_gen: v7x
topology: tpu7x:2x2x1
jax: 0.10.0
libtpu: 0.0.40
codegen_flags: <defaults>
</compile_context>

<pallas_src>
import functools

import jax
import jax.numpy as jnp
from jax import lax
from jax.experimental import pallas as pl
from jax.experimental.pallas import tpu as pltpu


def _round_up(x, m):
    return ((x + m - 1) // m) * m


def _round_down(x, m):
    return (x // m) * m


def _write_partial(o_ref, row_sums):
    """Write 0.5 * sum(row_sums) at o_ref[0, 0, 0]; zeros elsewhere so the
    wrapper's jnp.sum over partials is exact."""
    s = 0.5 * jnp.sum(row_sums)
    r = lax.broadcasted_iota(jnp.int32, (1, 8, 128), 1)
    c = lax.broadcasted_iota(jnp.int32, (1, 8, 128), 2)
    o_ref[...] = jnp.where(jnp.logical_and(r == 0, c == 0), s, 0.0)


def _sigma_reg_kernel(x_ref, o_ref, acc_ref, *, b, n, tb, tn, gb, gn):
    """Per-row-block partial sum of log(det_Sigma).

    x_ref:   (tb, tn)     VMEM tile of det_Sigma
    o_ref:   (1, 8, 128)  VMEM output tile for this row block (partial sum at
                          [0, 0, 0], zeros elsewhere)
    acc_ref: (tb, 1)      VMEM row-sum accumulator (persists across the inner
                          'arbitrary' column axis; unused when gn == 1)
    """
    i = pl.program_id(0)  # row block    ("parallel")
    j = pl.program_id(1)  # column block ("arbitrary" reduction axis)

    single_col = gn == 1
    need_row_mask = (b % tb) != 0
    need_col_mask = (n % tn) != 0

    if not single_col:
        @pl.when(j == 0)
        def _():
            acc_ref[...] = jnp.zeros_like(acc_ref)

    x = x_ref[...].astype(jnp.float32)

    def row_logsum(v):
        # (tb, 1) per-row sum of log; one cross-lane reduce per step (XLU).
        return jnp.sum(jnp.log(v), axis=-1, keepdims=True)

    def emit(contrib):
        if single_col:
            _write_partial(o_ref, contrib)
        else:
            acc_ref[...] += contrib

    if need_row_mask or need_col_mask:
        # Run the masked path only on edge blocks; interior blocks take the
        # plain path (no iota/compare/select).
        is_edge = None
        if need_row_mask:
            is_edge = i == gb - 1
        if need_col_mask:
            ce = j == gn - 1
            is_edge = ce if is_edge is None else jnp.logical_or(is_edge, ce)

        @pl.when(is_edge)
        def _():
            mask = None
            if need_row_mask:
                rows = i * tb + lax.broadcasted_iota(jnp.int32, (tb, tn), 0)
                mask = rows < b
            if need_col_mask:
                cols = j * tn + lax.broadcasted_iota(jnp.int32, (tb, tn), 1)
                cm = cols < n
                mask = cm if mask is None else jnp.logical_and(mask, cm)
            # Mask BEFORE the log: padded elements become log(1.0) == 0.
            emit(row_logsum(jnp.where(mask, x, 1.0)))

        @pl.when(jnp.logical_not(is_edge))
        def _():
            emit(row_logsum(x))
    else:
        emit(row_logsum(x))

    if not single_col:
        @pl.when(j == gn - 1)
        def _():
            _write_partial(o_ref, acc_ref[...])


def _pick_tiles(b, n, elem_bytes, max_block_bytes):
    """Choose (tb, tn): layout-legal, ~max_block_bytes per block, and >= 2
    balanced row blocks when B allows (v7x megacore)."""
    budget_elems = max(1024, max_block_bytes // elem_bytes)

    # Row tile: two balanced blocks when B >= 16, otherwise the full (small) B.
    if b >= 16:
        tb = _round_up(pl.cdiv(b, 2), 8)
    else:
        tb = b
    # Never let a single 128-lane strip blow the byte budget (huge-B, tiny-N).
    max_tb = max(8, _round_down(budget_elems // 128, 8))
    if tb > max_tb:
        tb = max_tb if b > max_tb else b

    # Column tile: full N if it fits the budget, else largest multiple of 128.
    max_tn = max(128, budget_elems // max(tb, 1))
    if n <= max_tn:
        tn = n
    else:
        tn = max(128, _round_down(max_tn, 128))
    return tb, tn


def sigma_reg(det_sigma: jax.Array, *, max_block_bytes: int = 8 * 1024 * 1024) -> jax.Array:
    """Pallas implementation of SigmaReg.forward. Returns a scalar (float32)."""
    assert det_sigma.ndim == 2, "expected det_Sigma of shape (B, N)"
    b, n = det_sigma.shape
    elem_bytes = jnp.dtype(det_sigma.dtype).itemsize
    tb, tn = _pick_tiles(b, n, elem_bytes, max_block_bytes)
    gb = pl.cdiv(b, tb)
    gn = pl.cdiv(n, tn)

    # VMEM budget: double-buffered input block + tiny accumulator/output,
    # with headroom; capped well within v7x's 64 MiB physical VMEM.
    block_bytes = _round_up(tb, 8) * _round_up(tn, 128) * elem_bytes
    vmem_limit = int(min(max(3 * block_bytes + (2 << 20), 32 << 20), 56 << 20))

    kernel = functools.partial(
        _sigma_reg_kernel, b=b, n=n, tb=tb, tn=tn, gb=gb, gn=gn
    )

    partials = pl.pallas_call(
        kernel,
        out_shape=jax.ShapeDtypeStruct((gb, 8, 128), jnp.float32),
        grid_spec=pltpu.PrefetchScalarGridSpec(
            num_scalar_prefetch=0,
            grid=(gb, gn),
            in_specs=[pl.BlockSpec((tb, tn), lambda i, j: (i, j))],
            out_specs=pl.BlockSpec((1, 8, 128), lambda i, j: (i, 0, 0)),
            scratch_shapes=[pltpu.VMEM((tb, 1), jnp.float32)],
        ),
        compiler_params=pltpu.CompilerParams(
            dimension_semantics=("parallel", "arbitrary"),
            vmem_limit_bytes=vmem_limit,
        ),
        cost_estimate=pl.CostEstimate(
            flops=b * n, transcendentals=b * n, bytes_accessed=elem_bytes * b * n
        ),
    )(det_sigma)

    # mean(0.5*log(x), dim=1).mean() == overall mean for uniform row lengths.
    return jnp.sum(partials) / (b * n)


def sigma_reg_ref(det_sigma: jax.Array) -> jax.Array:
    """Pure-JAX reference matching the PyTorch semantics exactly."""
    return jnp.mean(jnp.mean(0.5 * jnp.log(det_sigma), axis=1))


if __name__ == "__main__":
    key = jax.random.PRNGKey(0)
    k0, k1, k2 = jax.random.split(key, 3)

    # Primary small test: (B, N) with N as the dim=1 reduction axis.
    # Exercises the gn==1 (full-N block) specialization, no masking.
    B, N = 8, 256
    det_sigma = jax.random.uniform(k0, (B, N), dtype=jnp.float32, minval=0.5, maxval=2.0)
    out = jax.block_until_ready(sigma_reg(det_sigma))
    ref = sigma_reg_ref(det_sigma)
    assert jnp.allclose(out, ref, rtol=1e-5, atol=1e-6), (out, ref)

    # Two balanced parallel row blocks + row-edge masking, gn==1 path.
    B2, N2 = 520, 1500
    det_sigma2 = jax.random.uniform(k1, (B2, N2), dtype=jnp.float32, minval=0.5, maxval=2.0)
    out2 = jax.block_until_ready(sigma_reg(det_sigma2))
    ref2 = sigma_reg_ref(det_sigma2)
    assert jnp.allclose(out2, ref2, rtol=1e-5, atol=1e-6), (out2, ref2)

    # Force a tiny block budget to exercise the multi-column-block accumulator
    # path plus both row- and column-edge masking.
    B3, N3 = 40, 700
    det_sigma3 = jax.random.uniform(k2, (B3, N3), dtype=jnp.float32, minval=0.5, maxval=2.0)
    out3 = jax.block_until_ready(sigma_reg(det_sigma3, max_block_bytes=64 * 1024))
    ref3 = sigma_reg_ref(det_sigma3)
    assert jnp.allclose(out3, ref3, rtol=1e-5, atol=1e-6), (out3, ref3)

    print("KERNEL_OK")
</pallas_src>

<mosaic_0001>
module attributes {stable_mosaic.version = 11 : i64} {
  func.func @_sigma_reg_kernel(%arg0: i32, %arg1: i32, %arg2: memref<8x256xf32, #tpu.memory_space<vmem>>, %arg3: memref<1x8x128xf32, #tpu.memory_space<vmem>>, %arg4: memref<8x1xf32, #tpu.memory_space<vmem>>) attributes {dimension_semantics = [#tpu.dimension_semantics<parallel>, #tpu.dimension_semantics<arbitrary>], iteration_bounds = array<i64: 1, 1>, scalar_prefetch = 0 : i64, scratch_operands = 1 : i64, tpu.core_type = #tpu.core_type<tc>, window_params = [{transform_indices = @transform_0, window_bounds = array<i64: 8, 256>}, {transform_indices = @transform_1, window_bounds = array<i64: 1, 8, 128>}]} {
    %c0 = arith.constant 0 : index
    %c0_0 = arith.constant 0 : index
    %0 = vector.load %arg2[%c0, %c0_0] : memref<8x256xf32, #tpu.memory_space<vmem>>, vector<8x256xf32>
    %1 = math.log %0 : vector<8x256xf32>
    %cst = arith.constant dense<0.000000e+00> : vector<8xf32>
    %2 = vector.multi_reduction <add>, %1, %cst [1] : vector<8x256xf32> to vector<8xf32>
    %3 = vector.shape_cast %2 : vector<8xf32> to vector<8x1xf32>
    %4 = vector.shape_cast %3 : vector<8x1xf32> to vector<1x8x1xf32>
    %cst_1 = arith.constant dense<0.000000e+00> : vector<1xf32>
    %5 = vector.multi_reduction <add>, %4, %cst_1 [1, 2] : vector<1x8x1xf32> to vector<1xf32>
    %6 = vector.shape_cast %5 : vector<1xf32> to vector<1x1x1xf32>
    %7 = vector.extract %6[0, 0, 0] : f32 from vector<1x1x1xf32>
    %cst_2 = arith.constant 5.000000e-01 : f32
    %8 = arith.mulf %cst_2, %7 : f32
    %9 = tpu.iota {dimensions = array<i32: 1>} : vector<1x8x128xi32>
    %10 = tpu.iota {dimensions = array<i32: 2>} : vector<1x8x128xi32>
    %c0_i32 = arith.constant 0 : i32
    %11 = vector.broadcast %c0_i32 : i32 to vector<1x8x128xi32>
    %12 = arith.cmpi eq, %9, %11 : vector<1x8x128xi32>
    %c0_i32_3 = arith.constant 0 : i32
    %13 = vector.broadcast %c0_i32_3 : i32 to vector<1x8x128xi32>
    %14 = arith.cmpi eq, %10, %13 : vector<1x8x128xi32>
    %15 = arith.andi %12, %14 : vector<1x8x128xi1>
    %cst_4 = arith.constant 0.000000e+00 : f32
    %16 = vector.broadcast %8 : f32 to vector<1x8x128xf32>
    %17 = vector.broadcast %cst_4 : f32 to vector<1x8x128xf32>
    %18 = arith.select %15, %16, %17 : vector<1x8x128xi1>, vector<1x8x128xf32>
    %c0_5 = arith.constant 0 : index
    %c0_6 = arith.constant 0 : index
    %c0_7 = arith.constant 0 : index
    %19 = vector.load %arg3[%c0_5, %c0_6, %c0_7] : memref<1x8x128xf32, #tpu.memory_space<vmem>>, vector<1x8x128xf32>
    tpu.vector_store %arg3[%c0_5, %c0_6, %c0_7], %18 {strides = array<i32>} : memref<1x8x128xf32, #tpu.memory_space<vmem>>, vector<1x8x128xf32>,
    return
  }
  func.func @transform_0(%arg0: i32, %arg1: i32) -> (i32, i32) {
    %c0_i32 = arith.constant 0 : i32
    return %arg0, %arg1 : i32, i32
  }
  func.func @transform_1(%arg0: i32, %arg1: i32) -> (i32, i32, i32) {
    %c0_i32 = arith.constant 0 : i32
    %c0_i32_0 = arith.constant 0 : i32
    %c0_i32_1 = arith.constant 0 : i32
    return %arg0, %c0_i32, %c0_i32_0 : i32, i32, i32
  }
}

</mosaic_0001>

<llo_original>
// kernel: tpu_custom_call.1
$region0: #{tpu_custom_call.1}
  #allocation0 [shape = 'u32[]', space=smem, size = 0x4, offset = 0x4, fixed_abs, tag = 'smem constant byte address 0x4 - core index']
  #allocation1 [shape = 'u32[144,128]{1,0:T(1,128)}', space=vmem, size = 0x12000, scoped, tag = 'internal scratch']
  #allocation2 [shape = 'f32[8,1]{1,0:T(8,128)}', space=vmem, size = 0x1000, scoped, tag = 'scratch operand']
  %s0 = inlined_call_operand.hbm [shape: f32[8,256], index: 0, kind: input, shape index: {}]
  %s1 = inlined_call_operand.hbm [shape: f32[1,8,128], index: 1, kind: output, shape index: {}]
  %s2 = sld [smem:[#allocation0]]
  $region18: #{tpu_custom_call.1} parent=0
    _
  %s4 = ssub.s32 1, %s2
  %s5 = scalar_select 0, %s4, %s2
  $region1: #{tpu_custom_call.1} parent=0
    #allocation3 [shape = 'u8[8192]{0}', space=vmem, size = 0x2000, scoped, tag = 'input window, operand 0, single buffered']
    #allocation4 [shape = 's32[1]{0}', space=sflag, size = 0x4, scoped, tag = 'scoped memory for tpu_custom_call.1']
    #allocation5 [shape = 's32[1]{0}', space=sflag, size = 0x4, scoped, tag = 'scoped memory for tpu_custom_call.1']
    #allocation6 [shape = 'u8[4096]{0}', space=vmem, size = 0x1000, scoped, tag = 'output window, operand 0, single buffered']
    %6 = vsyncpa [#allocation4], 0
    %7 = vsyncpa [#allocation5], 0
    // Predicated region
    $region2: #{tpu_custom_call.1} parent=1 // pred_check
      _
    $region3: #{tpu_custom_call.1} parent=1 // pred_check_branch
      %9 = sbr.rel (0) target = $region5
    $region4: #{tpu_custom_call.1} parent=1 // pred_region
      %s11 = ssub.s32 256, 256
      %12 = vsyncadd [#allocation4], %s11
      %s14 = sshll.u32 [#allocation3], 4
      %s15 = int_to_ptr.vmem [resolvable:$true] %s14
      %17 = dma.hbm_to_vmem [thread:$0]  %s0, 256, %s15, [#allocation4]
    $region5: #{tpu_custom_call.1} parent=1 // pred_fallthru
      _
    // Predicated region
    $region6: #{tpu_custom_call.1} parent=1 // pred_check
      _
    $region7: #{tpu_custom_call.1} parent=1 // pred_check_branch
      %19 = sbr.rel (0) target = $region9
    $region8: #{tpu_custom_call.1} parent=1 // pred_region
      %20 = dma.done [#allocation4], 256
    $region9: #{tpu_custom_call.1} parent=1 // pred_fallthru
      _
    %v21 = vld [vmem:[#allocation3] sm:$0xff]
    %v22 = vld [vmem:[#allocation3 + $0x8] sm:$0xff]
    %v23 = vlog2.pop %v21
    %v24 = vmul.f32 %v23, 0.6931472
    %v25 = vlog2.pop %v22
    %v26 = vmul.f32 %v25, 0.6931472
    %v27 = vadd.f32 %v24, %v26
    %28 = vadd.xlane.f32.xlu0 %v27
    %v29 = vpop.xlane.xlu0 %28
    %vm30 = vcmask 7168
    %v31 = vsel %vm30, %v29, 0.0
    %32 = vadd.xlane.f32.xlu0 %v31
    %v33 = vpop.xlane.xlu0 %32
    %v34 = vrot.slane %v33, 4
    %v35 = vadd.f32 %v33, %v34
    %v36 = vrot.slane %v35, 2
    %v37 = vadd.f32 %v35, %v36
    %v38 = vrot.slane %v37, 1
    %v39 = vadd.f32 %v37, %v38
    %s40 = vtos %v39
    %s41 = smul.f32 %s40, 0.5
    %v42 = vlaneseq
    %v43 = vshrl.u32 %v42, 7
    %v44 = vlaneseq
    %v45 = vand.u32 %v44, 127
    %vm46 = vcmp.eq.s32.totalorder %v43, 0
    %vm47 = vcmp.eq.s32.totalorder %v45, 0
    %vm48 = vmand %vm46, %vm47
    %v49 = vstv %s41
    %v50 = vsel %vm48, %v49, 0.0
    %51 = vst [vmem:[#allocation6] sm:$0xff] %v50
    // Predicated region
    $region10: #{tpu_custom_call.1} parent=1 // pred_check
      _
    $region11: #{tpu_custom_call.1} parent=1 // pred_check_branch
      %53 = sbr.rel (0) target = $region13
    $region12: #{tpu_custom_call.1} parent=1 // pred_region
      %s55 = ssub.s32 128, 128
      %56 = vsyncadd [#allocation5], %s55
      %s58 = sshll.u32 [#allocation6], 4
      %s59 = int_to_ptr.vmem [resolvable:$true] %s58
      %61 = dma.vmem_to_hbm [thread:$0]  %s59, 128, %s1, [#allocation5]
    $region13: #{tpu_custom_call.1} parent=1 // pred_fallthru
      _
    // Predicated region
    $region14: #{tpu_custom_call.1} parent=1 // pred_check
      _
    $region15: #{tpu_custom_call.1} parent=1 // pred_check_branch
      %63 = sbr.rel (0) target = $region17
    $region16: #{tpu_custom_call.1} parent=1 // pred_region
      %64 = dma.done [#allocation5], 128
    $region17: #{tpu_custom_call.1} parent=1 // pred_fallthru
      _
    %65 = vsyncpa [#allocation4], 1
    %66 = vsyncpa [#allocation5], 1

</llo_original>
